<compile_context>
chip_gen: v7x
topology: tpu7x:2x2x1
jax: 0.10.0
libtpu: 0.0.40
codegen_flags: <defaults>
</compile_context>

<pallas_src>
import functools

import jax
import jax.numpy as jnp
from jax.experimental import pallas as pl
from jax.experimental.pallas import tpu as pltpu


# ----------------------------- Pallas kernel -------------------------------

def _feature_kernel(mq, x_ref, idx_ref, w_ref, bq_ref, bn_ref, emb_ref, out_ref):
    """Per (TM, :) row tile:

      y      = x_bf16 @ [Wq_pad | Wn_pad]_bf16      (MXU, f32 accumulate)
      proj   = tanh( select_half(y, row<mq) + select(bias) )
      emb    = twohot(ner, pos) @ emb_w_pad          (exact f32, tiny K)
      out    = proj + emb                            (lane-dense 128-wide store)

    W/bias are zero beyond column E, emb_w_pad is zero in the projection lanes,
    so the add-based "concat" is exact.
    """
    f32 = jnp.float32
    tm = x_ref.shape[0]
    op = out_ref.shape[1]                       # 128-lane padded output width
    emb_w = emb_ref[...]                        # (v_ner + v_pos, op), resident
    v_tot = emb_w.shape[0]

    # Which rows of this tile are query rows (the rest are node rows).
    row0 = pl.program_id(0) * tm
    row_ids = row0 + jax.lax.broadcasted_iota(jnp.int32, (tm, 1), 0)
    is_q = row_ids < mq                         # (tm, 1) bool

    # Combined projection: one bf16 MXU matmul for both encoders.
    y = jnp.dot(x_ref[...], w_ref[...], preferred_element_type=f32)   # (tm, 2*op)
    y_sel = jnp.where(is_q, y[:, :op], y[:, op:])                     # (tm, op)
    b_sel = jnp.where(is_q, bq_ref[...], bn_ref[...])                 # (tm, op)
    proj = jnp.tanh(y_sel + b_sel)

    # Fused embedding lookup: two-hot row (pos index already shifted by v_ner).
    idx = idx_ref[...]                                                # (tm, 2) int32
    lane = jax.lax.broadcasted_iota(jnp.int32, (tm, v_tot), 1)
    onehot = jnp.logical_or(lane == idx[:, 0:1], lane == idx[:, 1:2]).astype(f32)
    emb = jnp.dot(onehot, emb_w, preferred_element_type=f32)          # (tm, op)

    out_ref[...] = (proj + emb).astype(out_ref.dtype)


def feature_forward(x, idx, w_comb, bq_pad, bn_pad, emb_w_pad, *, mq, tm):
    """M-tiled, pipelined pallas_call over the stacked (query; node) rows."""
    m, d = x.shape
    op2 = w_comb.shape[1]
    op = op2 // 2
    v_tot = emb_w_pad.shape[0]
    assert m % tm == 0

    kernel = functools.partial(_feature_kernel, mq)
    return pl.pallas_call(
        kernel,
        out_shape=jax.ShapeDtypeStruct((m, op), jnp.float32),
        grid_spec=pl.GridSpec(
            grid=(m // tm,),
            in_specs=[
                pl.BlockSpec((tm, d), lambda i: (i, 0)),        # x rows (bf16)
                pl.BlockSpec((tm, 2), lambda i: (i, 0)),        # merged ner/pos idx
                pl.BlockSpec((d, op2), lambda i: (0, 0)),       # [Wq | Wn] resident
                pl.BlockSpec((1, op), lambda i: (0, 0)),        # bq resident
                pl.BlockSpec((1, op), lambda i: (0, 0)),        # bn resident
                pl.BlockSpec((v_tot, op), lambda i: (0, 0)),    # emb table resident
            ],
            out_specs=pl.BlockSpec((tm, op), lambda i: (i, 0)),
        ),
        compiler_params=pltpu.CompilerParams(
            dimension_semantics=("parallel",),                  # 2x on v7x megacore
            vmem_limit_bytes=32 * 1024 * 1024),                 # safe on v5e/v6e/v7x
    )(x, idx, w_comb, bq_pad, bn_pad, emb_w_pad)


# ------------------------------ helpers -------------------------------------

def _round_up(x, m):
    return ((x + m - 1) // m) * m


def _pad_rows(x, target_rows):
    pad = target_rows - x.shape[0]
    if pad == 0:
        return x
    return jnp.pad(x, ((0, pad),) + ((0, 0),) * (x.ndim - 1))


# --------------------------- FeatureLayer (JAX) ----------------------------

class FeatureLayerPallas:
    # Max rows per tile; 512 puts the tiled stream near the measured HBM roofline
    # while keeping per-tile VMEM (~2.5 MB double-buffered) tiny on all gens.
    TM_MAX = 512

    def __init__(self, key, *, encoder_input_size=300, encoding_size=32,
                 max_query_size=8, max_nodes=16,
                 ner_dict_size=10, pos_dict_size=12,
                 ner_emb_size=8, pos_emb_size=8):
        self.encoder_input_size = encoder_input_size
        self.encoding_size = encoding_size
        self.max_query_size = max_query_size
        self.max_nodes = max_nodes
        self.ner_dict_size = ner_dict_size
        self.ner_emb_size = ner_emb_size
        self.pos_emb_size = pos_emb_size

        self.out_width = encoding_size + ner_emb_size + pos_emb_size
        self.out_pad = max(128, pl.cdiv(self.out_width, 128) * 128)

        k = jax.random.split(key, 6)
        s = 1.0 / jnp.sqrt(encoder_input_size)
        # nn.Linear stores weight as (out, in); we keep (in, out) for the matmul.
        self.q_w = jax.random.uniform(k[0], (encoder_input_size, encoding_size),
                                      jnp.float32, -s, s)
        self.q_b = jax.random.uniform(k[1], (encoding_size,), jnp.float32, -s, s)
        self.n_w = jax.random.uniform(k[2], (encoder_input_size, encoding_size),
                                      jnp.float32, -s, s)
        self.n_b = jax.random.uniform(k[3], (encoding_size,), jnp.float32, -s, s)
        # nn.Embedding tables (N(0,1) init, PyTorch default).
        self.ner_emb = jax.random.normal(k[4], (ner_dict_size, ner_emb_size), jnp.float32)
        self.pos_emb = jax.random.normal(k[5], (pos_dict_size, pos_emb_size), jnp.float32)

        # ----- kernel-ready parameters (built once) -----
        E, OP, D = encoding_size, self.out_pad, encoder_input_size
        # Side-by-side projection weights: query encoder in lanes [0:OP),
        # node encoder in lanes [OP:2*OP); zero beyond column E of each half.
        w_comb = jnp.zeros((D, 2 * OP), jnp.float32)
        w_comb = w_comb.at[:, :E].set(self.q_w)
        w_comb = w_comb.at[:, OP:OP + E].set(self.n_w)
        self.w_comb = w_comb.astype(jnp.bfloat16)          # bf16 MXU path
        self.q_b_pad = jnp.zeros((1, OP), jnp.float32).at[:, :E].set(self.q_b)
        self.n_b_pad = jnp.zeros((1, OP), jnp.float32).at[:, :E].set(self.n_b)
        # ner/pos tables placed directly into their final output columns so the
        # in-kernel one-hot matmul produces the "concatenated" layout for free.
        emb_w = jnp.zeros((ner_dict_size + pos_dict_size, OP), jnp.float32)
        emb_w = emb_w.at[:ner_dict_size, E:E + ner_emb_size].set(self.ner_emb)
        emb_w = emb_w.at[ner_dict_size:,
                         E + ner_emb_size:E + ner_emb_size + pos_emb_size].set(self.pos_emb)
        self.emb_w_pad = emb_w

    def __call__(self, nodes_elmo, query_elmo, nodes_glove, query_glove,
                 nodes_ner, nodes_pos, query_ner, query_pos, query_lengths):
        # use_elmo=False, use_glove=True -> features are the glove tensors.
        query_flat = query_glove            # (B, Q, D)
        nodes_flat = nodes_glove            # (B, N, D)
        B, Q, D = query_flat.shape
        _, N, _ = nodes_flat.shape
        mq, mn = B * Q, B * N
        m_total = mq + mn

        tm = min(self.TM_MAX, _round_up(m_total, 8))
        m_pad = _round_up(m_total, tm)

        # Stack query rows then node rows; cast to bf16 (fuses with the concat/pad).
        x = jnp.concatenate([query_flat.reshape(mq, D),
                             nodes_flat.reshape(mn, D)], axis=0)
        x = _pad_rows(x, m_pad).astype(jnp.bfloat16)

        # Merge the four index tensors into one (M, 2) int32 array; pre-shift pos
        # by ner_dict_size so the kernel's two-hot needs no extra add.
        # (query_ner_emb[:, :new_query_length] in the reference is a no-op for the
        #  linear encoder, so indices map 1:1 to rows.)
        v_ner = self.ner_dict_size
        q_idx = jnp.stack([query_ner.reshape(mq).astype(jnp.int32),
                           query_pos.reshape(mq).astype(jnp.int32) + v_ner], axis=1)
        n_idx = jnp.stack([nodes_ner.reshape(mn).astype(jnp.int32),
                           nodes_pos.reshape(mn).astype(jnp.int32) + v_ner], axis=1)
        idx = _pad_rows(jnp.concatenate([q_idx, n_idx], axis=0), m_pad)

        out = feature_forward(x, idx, self.w_comb, self.q_b_pad, self.n_b_pad,
                              self.emb_w_pad, mq=mq, tm=tm)

        # NOTE: these row/col slices cost one extra HBM pass over the outputs;
        # downstream consumers that tolerate the 128-lane padded slab should read
        # `out` directly (query rows [0:mq), node rows [mq:mq+mn), lanes [0:48)).
        W = self.out_width
        query_compress = out[:mq, :W].reshape(B, Q, W)
        nodes_compress = out[mq:mq + mn, :W].reshape(B, N, W)
        return nodes_compress, query_compress


# --------------------------------- main ------------------------------------

if __name__ == "__main__":
    key = jax.random.PRNGKey(0)
    kp, kd = jax.random.split(key)

    B, Q, N, D = 2, 8, 16, 300
    E, NER_V, POS_V, NER_E, POS_E = 32, 10, 12, 8, 8

    layer = FeatureLayerPallas(kp, encoder_input_size=D, encoding_size=E,
                               max_query_size=Q, max_nodes=N,
                               ner_dict_size=NER_V, pos_dict_size=POS_V,
                               ner_emb_size=NER_E, pos_emb_size=POS_E)

    kk = jax.random.split(kd, 6)
    nodes_glove = jax.random.normal(kk[0], (B, N, D), jnp.float32)
    query_glove = jax.random.normal(kk[1], (B, Q, D), jnp.float32)
    nodes_ner = jax.random.randint(kk[2], (B, N), 0, NER_V)
    nodes_pos = jax.random.randint(kk[3], (B, N), 0, POS_V)
    query_ner = jax.random.randint(kk[4], (B, Q), 0, NER_V)
    query_pos = jax.random.randint(kk[5], (B, Q), 0, POS_V)
    query_lengths = jnp.full((B,), Q, jnp.int32)   # unused for the linear encoder
    nodes_elmo = None                              # use_elmo=False
    query_elmo = None

    nodes_out, query_out = layer(nodes_elmo, query_elmo, nodes_glove, query_glove,
                                 nodes_ner, nodes_pos, query_ner, query_pos,
                                 query_lengths)
    jax.block_until_ready((nodes_out, query_out))

    # Pure-JAX f32 reference.
    ref_q = jnp.tanh(query_glove.reshape(B * Q, D) @ layer.q_w + layer.q_b).reshape(B, Q, E)
    ref_n = jnp.tanh(nodes_glove.reshape(B * N, D) @ layer.n_w + layer.n_b).reshape(B, N, E)
    ref_q_ner = jnp.take(layer.ner_emb, query_ner, axis=0)
    ref_q_pos = jnp.take(layer.pos_emb, query_pos, axis=0)
    ref_n_ner = jnp.take(layer.ner_emb, nodes_ner, axis=0)
    ref_n_pos = jnp.take(layer.pos_emb, nodes_pos, axis=0)

    assert query_out.shape == (B, Q, E + NER_E + POS_E)
    assert nodes_out.shape == (B, N, E + NER_E + POS_E)
    # Projection lanes use bf16 matmul inputs (f32 accumulate) -> relaxed tolerance.
    assert jnp.allclose(query_out[..., :E], ref_q, atol=2e-2, rtol=2e-2)
    assert jnp.allclose(nodes_out[..., :E], ref_n, atol=2e-2, rtol=2e-2)
    # Embedding lanes stay on an exact f32 one-hot path -> tight tolerance.
    assert jnp.allclose(query_out[..., E:E + NER_E], ref_q_ner, atol=1e-5)
    assert jnp.allclose(query_out[..., E + NER_E:], ref_q_pos, atol=1e-5)
    assert jnp.allclose(nodes_out[..., E:E + NER_E], ref_n_ner, atol=1e-5)
    assert jnp.allclose(nodes_out[..., E + NER_E:], ref_n_pos, atol=1e-5)

    print("KERNEL_OK")
</pallas_src>

<mosaic_0001>
module attributes {stable_mosaic.version = 11 : i64} {
  func.func @_feature_kernel(%arg0: i32, %arg1: memref<48x300xbf16, #tpu.memory_space<vmem>>, %arg2: memref<48x2xi32, #tpu.memory_space<vmem>>, %arg3: memref<300x256xbf16, #tpu.memory_space<vmem>>, %arg4: memref<1x128xf32, #tpu.memory_space<vmem>>, %arg5: memref<1x128xf32, #tpu.memory_space<vmem>>, %arg6: memref<22x128xf32, #tpu.memory_space<vmem>>, %arg7: memref<48x128xf32, #tpu.memory_space<vmem>>) attributes {dimension_semantics = [#tpu.dimension_semantics<parallel>], iteration_bounds = array<i64: 1>, scalar_prefetch = 0 : i64, scratch_operands = 0 : i64, tpu.core_type = #tpu.core_type<tc>, window_params = [{transform_indices = @transform_0, window_bounds = array<i64: 48, 300>}, {transform_indices = @transform_1, window_bounds = array<i64: 48, 2>}, {pipeline_mode = #tpu.pipeline_mode<synchronous>, transform_indices = @transform_2, window_bounds = array<i64: 300, 256>}, {pipeline_mode = #tpu.pipeline_mode<synchronous>, transform_indices = @transform_3, window_bounds = array<i64: 1, 128>}, {pipeline_mode = #tpu.pipeline_mode<synchronous>, transform_indices = @transform_4, window_bounds = array<i64: 1, 128>}, {pipeline_mode = #tpu.pipeline_mode<synchronous>, transform_indices = @transform_5, window_bounds = array<i64: 22, 128>}, {transform_indices = @transform_6, window_bounds = array<i64: 48, 128>}]} {
    %c0 = arith.constant 0 : index
    %c0_0 = arith.constant 0 : index
    %0 = vector.load %arg6[%c0, %c0_0] : memref<22x128xf32, #tpu.memory_space<vmem>>, vector<22x128xf32>
    %c48_i32 = arith.constant 48 : i32
    %1 = arith.muli %arg0, %c48_i32 : i32
    %2 = tpu.iota {dimensions = array<i32: 0>} : vector<48x1xi32>
    %3 = vector.broadcast %1 : i32 to vector<48x1xi32>
    %4 = arith.addi %3, %2 : vector<48x1xi32>
    %c16_i32 = arith.constant 16 : i32
    %5 = vector.broadcast %c16_i32 : i32 to vector<48x1xi32>
    %6 = arith.cmpi slt, %4, %5 : vector<48x1xi32>
    %c0_1 = arith.constant 0 : index
    %c0_2 = arith.constant 0 : index
    %7 = vector.load %arg1[%c0_1, %c0_2] : memref<48x300xbf16, #tpu.memory_space<vmem>>, vector<48x300xbf16>
    %c0_3 = arith.constant 0 : index
    %c0_4 = arith.constant 0 : index
    %8 = vector.load %arg3[%c0_3, %c0_4] : memref<300x256xbf16, #tpu.memory_space<vmem>>, vector<300x256xbf16>
    %cst = arith.constant dense<0.000000e+00> : vector<48x256xf32>
    %9 = tpu.matmul %7, %8, %cst {dimension_numbers = #tpu.dot_dimension_numbers<[1], [0], [0], [1], [0, 0, 1, 1], [], []>} : vector<48x300xbf16>, vector<300x256xbf16>, vector<48x256xf32> -> vector<48x256xf32>
    %10 = vector.extract_strided_slice %9 {offsets = [0, 0], sizes = [48, 128], strides = [1, 1]} : vector<48x256xf32> to vector<48x128xf32>
    %11 = vector.extract_strided_slice %9 {offsets = [0, 128], sizes = [48, 128], strides = [1, 1]} : vector<48x256xf32> to vector<48x128xf32>
    %12 = vector.shape_cast %6 : vector<48x1xi1> to vector<48x1xi1>
    %13 = vector.broadcast %12 : vector<48x1xi1> to vector<48x128xi1>
    %14 = arith.select %13, %10, %11 : vector<48x128xi1>, vector<48x128xf32>
    %c0_5 = arith.constant 0 : index
    %c0_6 = arith.constant 0 : index
    %15 = vector.load %arg4[%c0_5, %c0_6] : memref<1x128xf32, #tpu.memory_space<vmem>>, vector<1x128xf32>
    %c0_7 = arith.constant 0 : index
    %c0_8 = arith.constant 0 : index
    %16 = vector.load %arg5[%c0_7, %c0_8] : memref<1x128xf32, #tpu.memory_space<vmem>>, vector<1x128xf32>
    %17 = vector.shape_cast %6 : vector<48x1xi1> to vector<48x1xi1>
    %18 = vector.broadcast %17 : vector<48x1xi1> to vector<48x128xi1>
    %19 = vector.shape_cast %15 : vector<1x128xf32> to vector<1x128xf32>
    %20 = vector.broadcast %19 : vector<1x128xf32> to vector<48x128xf32>
    %21 = vector.shape_cast %16 : vector<1x128xf32> to vector<1x128xf32>
    %22 = vector.broadcast %21 : vector<1x128xf32> to vector<48x128xf32>
    %23 = arith.select %18, %20, %22 : vector<48x128xi1>, vector<48x128xf32>
    %24 = arith.addf %14, %23 : vector<48x128xf32>
    %25 = math.tanh %24 : vector<48x128xf32>
    %c0_9 = arith.constant 0 : index
    %c0_10 = arith.constant 0 : index
    %26 = vector.load %arg2[%c0_9, %c0_10] : memref<48x2xi32, #tpu.memory_space<vmem>>, vector<48x2xi32>
    %27 = tpu.iota {dimensions = array<i32: 1>} : vector<48x22xi32>
    %28 = vector.extract_strided_slice %26 {offsets = [0, 0], sizes = [48, 1], strides = [1, 1]} : vector<48x2xi32> to vector<48x1xi32>
    %29 = vector.broadcast %28 : vector<48x1xi32> to vector<48x22xi32>
    %30 = arith.cmpi eq, %27, %29 : vector<48x22xi32>
    %31 = vector.extract_strided_slice %26 {offsets = [0, 1], sizes = [48, 1], strides = [1, 1]} : vector<48x2xi32> to vector<48x1xi32>
    %32 = vector.broadcast %31 : vector<48x1xi32> to vector<48x22xi32>
    %33 = arith.cmpi eq, %27, %32 : vector<48x22xi32>
    %34 = arith.ori %30, %33 : vector<48x22xi1>
    %35 = arith.extui %34 : vector<48x22xi1> to vector<48x22xi32>
    %36 = arith.sitofp %35 : vector<48x22xi32> to vector<48x22xf32>
    %cst_11 = arith.constant dense<0.000000e+00> : vector<48x128xf32>
    %37 = tpu.matmul %36, %0, %cst_11 {dimension_numbers = #tpu.dot_dimension_numbers<[1], [0], [0], [1], [0, 0, 1, 1], [], []>} : vector<48x22xf32>, vector<22x128xf32>, vector<48x128xf32> -> vector<48x128xf32>
    %38 = arith.addf %25, %37 : vector<48x128xf32>
    %c0_12 = arith.constant 0 : index
    %c0_13 = arith.constant 0 : index
    %39 = vector.load %arg7[%c0_12, %c0_13] : memref<48x128xf32, #tpu.memory_space<vmem>>, vector<48x128xf32>
    tpu.vector_store %arg7[%c0_12, %c0_13], %38 {strides = array<i32>} : memref<48x128xf32, #tpu.memory_space<vmem>>, vector<48x128xf32>,
    return
  }
  func.func @transform_0(%arg0: i32) -> (i32, i32) {
    %c0_i32 = arith.constant 0 : i32
    %c0_i32_0 = arith.constant 0 : i32
    return %arg0, %c0_i32 : i32, i32
  }
  func.func @transform_1(%arg0: i32) -> (i32, i32) {
    %c0_i32 = arith.constant 0 : i32
    %c0_i32_0 = arith.constant 0 : i32
    return %arg0, %c0_i32 : i32, i32
  }
  func.func @transform_2(%arg0: i32) -> (i32, i32) {
    %c0_i32 = arith.constant 0 : i32
    %c0_i32_0 = arith.constant 0 : i32
    %c0_i32_1 = arith.constant 0 : i32
    return %c0_i32, %c0_i32_0 : i32, i32
  }
  func.func @transform_3(%arg0: i32) -> (i32, i32) {
    %c0_i32 = arith.constant 0 : i32
    %c0_i32_0 = arith.constant 0 : i32
    %c0_i32_1 = arith.constant 0 : i32
    return %c0_i32, %c0_i32_0 : i32, i32
  }
  func.func @transform_4(%arg0: i32) -> (i32, i32) {
    %c0_i32 = arith.constant 0 : i32
    %c0_i32_0 = arith.constant 0 : i32
    %c0_i32_1 = arith.constant 0 : i32
    return %c0_i32, %c0_i32_0 : i32, i32
  }
  func.func @transform_5(%arg0: i32) -> (i32, i32) {
    %c0_i32 = arith.constant 0 : i32
    %c0_i32_0 = arith.constant 0 : i32
    %c0_i32_1 = arith.constant 0 : i32
    return %c0_i32, %c0_i32_0 : i32, i32
  }
  func.func @transform_6(%arg0: i32) -> (i32, i32) {
    %c0_i32 = arith.constant 0 : i32
    %c0_i32_0 = arith.constant 0 : i32
    return %arg0, %c0_i32 : i32, i32
  }
}

</mosaic_0001>

<llo_original>
// kernel: tpu_custom_call.1
$region0: #{tpu_custom_call.1}
  #allocation0 [shape = 'u32[]', space=smem, size = 0x4, offset = 0x4, fixed_abs, tag = 'smem constant byte address 0x4 - core index']
  #allocation1 [shape = 'u32[144,128]{1,0:T(1,128)}', space=vmem, size = 0x12000, scoped, tag = 'internal scratch']
  %s0 = inlined_call_operand.hbm [shape: bf16[48,300], index: 0, kind: input, shape index: {}]
  %s1 = inlined_call_operand.vmem [shape: s32[48,2], index: 1, kind: input, shape index: {}]
  %s2 = inlined_call_operand.hbm [shape: bf16[300,256], index: 2, kind: input, shape index: {}]
  %s3 = inlined_call_operand.vmem [shape: f32[1,128], index: 3, kind: input, shape index: {}]
  %s4 = inlined_call_operand.vmem [shape: f32[1,128], index: 4, kind: input, shape index: {}]
  %s5 = inlined_call_operand.vmem [shape: f32[22,128], index: 5, kind: input, shape index: {}]
  %s6 = inlined_call_operand.hbm [shape: f32[48,128], index: 6, kind: output, shape index: {}]
  %s7 = sld [smem:[#allocation0]]
  $region42: #{tpu_custom_call.1} parent=0
    _
  %s9 = ssub.s32 1, %s7
  %s10 = scalar_select 0, %s9, %s7
  $region1: #{tpu_custom_call.1} parent=0
    #allocation2 [shape = 'u8[36864]{0}', space=vmem, size = 0x9000, scoped, tag = 'input window, operand 0, single buffered']
    #allocation3 [shape = 's32[1]{0}', space=sflag, size = 0x4, scoped, tag = 'scoped memory for tpu_custom_call.1']
    #allocation4 [shape = 's32[1]{0}', space=sflag, size = 0x4, scoped, tag = 'scoped memory for tpu_custom_call.1']
    #allocation5 [shape = 'u8[155648]{0}', space=vmem, size = 0x26000, scoped, tag = 'input window, operand 2, single buffered']
    #allocation6 [shape = 's32[1]{0}', space=sflag, size = 0x4, scoped, tag = 'scoped memory for tpu_custom_call.1']
    #allocation7 [shape = 'u8[24576]{0}', space=vmem, size = 0x6000, scoped, tag = 'output window, operand 0, single buffered']
    %11 = vsyncpa [#allocation3], 0
    %12 = vsyncpa [#allocation6], 0
    %13 = vsyncpa [#allocation4], 0
    // Predicated region
    $region2: #{tpu_custom_call.1} parent=1 // pred_check
      _
    $region3: #{tpu_custom_call.1} parent=1 // pred_check_branch
      %15 = sbr.rel (0) target = $region5
    $region4: #{tpu_custom_call.1} parent=1 // pred_region
      %s17 = ssub.s32 1152, 1152
      %18 = vsyncadd [#allocation3], %s17
      %s19 = sshll.u32 [#allocation2], 4
      %s20 = int_to_ptr.vmem [resolvable:$true] %s19
      %25 = dma.hbm_to_vmem [thread:$0]  %s0, 1152, %s20, [#allocation3], 192, 192, 12
    $region5: #{tpu_custom_call.1} parent=1 // pred_fallthru
      _
    // Predicated region
    $region6: #{tpu_custom_call.1} parent=1 // pred_check
      _
    $region7: #{tpu_custom_call.1} parent=1 // pred_check_branch
      %27 = sbr.rel (0) target = $region9
    $region8: #{tpu_custom_call.1} parent=1 // pred_region
      _
    $region9: #{tpu_custom_call.1} parent=1 // pred_fallthru
      _
    // Predicated region
    $region10: #{tpu_custom_call.1} parent=1 // pred_check
      _
    $region11: #{tpu_custom_call.1} parent=1 // pred_check_branch
      %29 = sbr.rel (0) target = $region13
    $region12: #{tpu_custom_call.1} parent=1 // pred_region
      %s31 = ssub.s32 4864, 4864
      %32 = vsyncadd [#allocation6], %s31
      %s33 = sshll.u32 [#allocation5], 4
      %s34 = int_to_ptr.vmem [resolvable:$true] %s33
      %39 = dma.hbm_to_vmem [thread:$0]  %s2, 4864, %s34, [#allocation6], 128, 128, 8
    $region13: #{tpu_custom_call.1} parent=1 // pred_fallthru
      _
    // Predicated region
    $region14: #{tpu_custom_call.1} parent=1 // pred_check
      _
    $region15: #{tpu_custom_call.1} parent=1 // pred_check_branch
      %41 = sbr.rel (0) target = $region17
    $region16: #{tpu_custom_call.1} parent=1 // pred_region
      _
    $region17: #{tpu_custom_call.1} parent=1 // pred_fallthru
      _
    // Predicated region
    $region18: #{tpu_custom_call.1} parent=1 // pred_check
      _
    $region19: #{tpu_custom_call.1} parent=1 // pred_check_branch
      %43 = sbr.rel (0) target = $region21
    $region20: #{tpu_custom_call.1} parent=1 // pred_region
      _
    $region21: #{tpu_custom_call.1} parent=1 // pred_fallthru
      _
    // Predicated region
    $region22: #{tpu_custom_call.1} parent=1 // pred_check
      _
    $region23: #{tpu_custom_call.1} parent=1 // pred_check_branch
      %45 = sbr.rel (0) target = $region25
    $region24: #{tpu_custom_call.1} parent=1 // pred_region
      _
    $region25: #{tpu_custom_call.1} parent=1 // pred_fallthru
      _
    // Predicated region
    $region26: #{tpu_custom_call.1} parent=1 // pred_check
      _
    $region27: #{tpu_custom_call.1} parent=1 // pred_check_branch
      %47 = sbr.rel (0) target = $region29
    $region28: #{tpu_custom_call.1} parent=1 // pred_region
      %48 = dma.done [#allocation3], 1152
    $region29: #{tpu_custom_call.1} parent=1 // pred_fallthru
      _
    // Predicated region
    $region30: #{tpu_custom_call.1} parent=1 // pred_check
      _
    $region31: #{tpu_custom_call.1} parent=1 // pred_check_branch
      %50 = sbr.rel (0) target = $region33
    $region32: #{tpu_custom_call.1} parent=1 // pred_region
      %51 = dma.done [#allocation6], 4864
    $region33: #{tpu_custom_call.1} parent=1 // pred_fallthru
      _
    %v53 = vld [vmem:[%s5] sm:$0xff]
    %v54 = vld [vmem:[%s5 + $0x8] sm:$0xff]
    %v55 = vld [vmem:[%s5 + $0x10] sm:$0x3f]
    %s56 = smul.u32 0, 48
    %v57 = vlaneseq
    %v58 = vshrl.u32 %v57, 7
    %v59 = vadd.s32 %v58, 8
    %v60 = vadd.s32 %v58, 16
    %v61 = vadd.s32 %v58, 24
    %v62 = vadd.s32 %v58, 32
    %v63 = vadd.s32 %v58, 40
    %v64 = vstv %s56
    %v65 = vadd.s32 %v64, %v58
    %v66 = vadd.s32 %v64, %v59
    %v67 = vadd.s32 %v64, %v60
    %v68 = vadd.s32 %v64, %v61
    %v69 = vadd.s32 %v64, %v62
    %v70 = vadd.s32 %v64, %v63
    %vm71 = vcmp.lt.s32.totalorder %v65, 16
    %vm72 = vcmp.lt.s32.totalorder %v66, 16
    %vm73 = vcmp.lt.s32.totalorder %v67, 16
    %vm74 = vcmp.lt.s32.totalorder %v68, 16
    %vm75 = vcmp.lt.s32.totalorder %v69, 16
    %vm76 = vcmp.lt.s32.totalorder %v70, 16
    %v77 = vld [vmem:[#allocation2] sm:$0xff]
    %v78 = vld [vmem:[#allocation2 + $0x8] sm:$0xf]
    %v79 = vld [vmem:[#allocation2 + $0xc] sm:$0xff]
    %v80 = vld [vmem:[#allocation2 + $0x14] sm:$0xf]
    %v81 = vld [vmem:[#allocation2 + $0x18] sm:$0xff]
    %v82 = vld [vmem:[#allocation2 + $0x20] sm:$0xf]
    %v83 = vld [vmem:[#allocation2 + $0x24] sm:$0xff]
    %v84 = vld [vmem:[#allocation2 + $0x2c] sm:$0xf]
    %v85 = vld [vmem:[#allocation2 + $0x30] sm:$0xff]
    %v86 = vld [vmem:[#allocation2 + $0x38] sm:$0xf]
    %v87 = vld [vmem:[#allocation2 + $0x3c] sm:$0xff]
    %v88 = vld [vmem:[#allocation2 + $0x44] sm:$0xf]
    %v89 = vld [vmem:[#allocation5] sm:$0xff]
    %v90 = vld [vmem:[#allocation5 + $0x8] sm:$0xff]
    %v91 = vld [vmem:[#allocation5 + $0x10] sm:$0xff]
    %v92 = vld [vmem:[#allocation5 + $0x18] sm:$0xff]
    %v93 = vld [vmem:[#allocation5 + $0x20] sm:$0xff]
    %v94 = vld [vmem:[#allocation5 + $0x28] sm:$0xff]
    %v95 = vld [vmem:[#allocation5 + $0x30] sm:$0xff]
    %v96 = vld [vmem:[#allocation5 + $0x38] sm:$0xff]
    %v97 = vld [vmem:[#allocation5 + $0x40] sm:$0xff]
    %v98 = vld [vmem:[#allocation5 + $0x48] sm:$0xff]
    %v99 = vld [vmem:[#allocation5 + $0x50] sm:$0xff]
    %v100 = vld [vmem:[#allocation5 + $0x58] sm:$0xff]
    %v101 = vld [vmem:[#allocation5 + $0x60] sm:$0xff]
    %v102 = vld [vmem:[#allocation5 + $0x68] sm:$0xff]
    %v103 = vld [vmem:[#allocation5 + $0x70] sm:$0xff]
    %v104 = vld [vmem:[#allocation5 + $0x78] sm:$0xff]
    %v105 = vld [vmem:[#allocation5 + $0x80] sm:$0xff]
    %v106 = vld [vmem:[#allocation5 + $0x88] sm:$0xff]
    %v107 = vld [vmem:[#allocation5 + $0x90] sm:$0xff]
    %v108 = vld [vmem:[#allocation5 + $0x98] sm:$0xff]
    %v109 = vld [vmem:[#allocation5 + $0xa0] sm:$0xff]
    %v110 = vld [vmem:[#allocation5 + $0xa8] sm:$0xff]
    %v111 = vld [vmem:[#allocation5 + $0xb0] sm:$0xff]
    %v112 = vld [vmem:[#allocation5 + $0xb8] sm:$0xff]
    %v113 = vld [vmem:[#allocation5 + $0xc0] sm:$0xff]
    %v114 = vld [vmem:[#allocation5 + $0xc8] sm:$0xff]
    %v115 = vld [vmem:[#allocation5 + $0xd0] sm:$0xff]
    %v116 = vld [vmem:[#allocation5 + $0xd8] sm:$0xff]
    %v117 = vld [vmem:[#allocation5 + $0xe0] sm:$0xff]
    %v118 = vld [vmem:[#allocation5 + $0xe8] sm:$0xff]
    %v119 = vld [vmem:[#allocation5 + $0xf0] sm:$0xff]
    %v120 = vld [vmem:[#allocation5 + $0xf8] sm:$0xff]
    %v121 = vld [vmem:[#allocation5 + $0x100] sm:$0xff]
    %v122 = vld [vmem:[#allocation5 + $0x108] sm:$0xff]
    %v123 = vld [vmem:[#allocation5 + $0x110] sm:$0xff]
    %v124 = vld [vmem:[#allocation5 + $0x118] sm:$0xff]
    %v125 = vld [vmem:[#allocation5 + $0x120] sm:$0xff]
    %v126 = vld [vmem:[#allocation5 + $0x128] sm:$0x33]
    %v139 = vunpack.c.l.b16 %v77
    %v140 = vunpack.c.h.b16 %v77
    %v141 = vunpack.c.l.b16 %v78
    %v142 = vunpack.c.l.b16 %v79
    %v143 = vunpack.c.h.b16 %v79
    %v144 = vunpack.c.l.b16 %v80
    %v145 = vunpack.c.l.b16 %v81
    %v146 = vunpack.c.h.b16 %v81
    %v147 = vunpack.c.l.b16 %v82
    %v148 = vunpack.c.l.b16 %v83
    %v149 = vunpack.c.h.b16 %v83
    %v150 = vunpack.c.l.b16 %v84
    %v151 = vunpack.c.l.b16 %v85
    %v152 = vunpack.c.h.b16 %v85
    %v153 = vunpack.c.l.b16 %v86
    %v154 = vunpack.c.l.b16 %v87
    %v155 = vunpack.c.h.b16 %v87
    %v156 = vunpack.c.l.b16 %v88
    %v157 = vpack.c.b16 %v142, %v139
    %v158 = vpack.c.b16 %v143, %v140
    %v159 = vpack.c.b16 %v144, %v141
    %v160 = vpack.c.b16 %v148, %v145
    %v161 = vpack.c.b16 %v149, %v146
    %v162 = vpack.c.b16 %v150, %v147
    %v163 = vpack.c.b16 %v154, %v151
    %v164 = vpack.c.b16 %v155, %v152
    %v165 = vpack.c.b16 %v156, %v153
    %v210 = vunpack.c.l.b16 %v89
    %v211 = vunpack.c.h.b16 %v89
    %v212 = vunpack.c.l.b16 %v90
    %v213 = vunpack.c.h.b16 %v90
    %v214 = vunpack.c.l.b16 %v91
    %v215 = vunpack.c.h.b16 %v91
    %v216 = vunpack.c.l.b16 %v92
    %v217 = vunpack.c.h.b16 %v92
    %v218 = vunpack.c.l.b16 %v93
    %v219 = vunpack.c.h.b16 %v93
    %v220 = vunpack.c.l.b16 %v94
    %v221 = vunpack.c.h.b16 %v94
    %v222 = vunpack.c.l.b16 %v95
    %v223 = vunpack.c.h.b16 %v95
    %v224 = vunpack.c.l.b16 %v96
    %v225 = vunpack.c.h.b16 %v96
    %v226 = vunpack.c.l.b16 %v97
    %v227 = vunpack.c.h.b16 %v97
    %v228 = vunpack.c.l.b16 %v98
    %v229 = vunpack.c.h.b16 %v98
    %v230 = vunpack.c.l.b16 %v99
    %v231 = vunpack.c.h.b16 %v99
    %v232 = vunpack.c.l.b16 %v100
    %v233 = vunpack.c.h.b16 %v100
    %v234 = vunpack.c.l.b16 %v101
    %v235 = vunpack.c.h.b16 %v101
    %v236 = vunpack.c.l.b16 %v102
    %v237 = vunpack.c.h.b16 %v102
    %v238 = vunpack.c.l.b16 %v103
    %v239 = vunpack.c.h.b16 %v103
    %v240 = vunpack.c.l.b16 %v104
    %v241 = vunpack.c.h.b16 %v104
    %v242 = vunpack.c.l.b16 %v105
    %v243 = vunpack.c.h.b16 %v105
    %v244 = vunpack.c.l.b16 %v106
    %v245 = vunpack.c.h.b16 %v106
    %v246 = vunpack.c.l.b16 %v107
    %v247 = vunpack.c.h.b16 %v107
    %v248 = vunpack.c.l.b16 %v108
    %v249 = vunpack.c.h.b16 %v108
    %v250 = vunpack.c.l.b16 %v109
    %v251 = vunpack.c.h.b16 %v109
    %v252 = vunpack.c.l.b16 %v110
    %v253 = vunpack.c.h.b16 %v110
    %v254 = vunpack.c.l.b16 %v111
    %v255 = vunpack.c.h.b16 %v111
    %v256 = vunpack.c.l.b16 %v112
    %v257 = vunpack.c.h.b16 %v112
    %v258 = vunpack.c.l.b16 %v113
    %v259 = vunpack.c.h.b16 %v113
    %v260 = vunpack.c.l.b16 %v114
    %v261 = vunpack.c.h.b16 %v114
    %v262 = vunpack.c.l.b16 %v115
    %v263 = vunpack.c.h.b16 %v115
    %v264 = vunpack.c.l.b16 %v116
    %v265 = vunpack.c.h.b16 %v116
    %v266 = vunpack.c.l.b16 %v117
    %v267 = vunpack.c.h.b16 %v117
    %v268 = vunpack.c.l.b16 %v118
    %v269 = vunpack.c.h.b16 %v118
    %v270 = vunpack.c.l.b16 %v119
    %v271 = vunpack.c.h.b16 %v119
    %v272 = vunpack.c.l.b16 %v120
    %v273 = vunpack.c.h.b16 %v120
    %v274 = vunpack.c.l.b16 %v121
    %v275 = vunpack.c.h.b16 %v121
    %v276 = vunpack.c.l.b16 %v122
    %v277 = vunpack.c.h.b16 %v122
    %v278 = vunpack.c.l.b16 %v123
    %v279 = vunpack.c.h.b16 %v123
    %v280 = vunpack.c.l.b16 %v124
    %v281 = vunpack.c.h.b16 %v124
    %v282 = vunpack.c.l.b16 %v125
    %v283 = vunpack.c.h.b16 %v125
    %v284 = vunpack.c.l.b16 %v126
    %v285 = vunpack.c.h.b16 %v126
    %v286 = vpack.c.b16 %v212, %v210
    %v287 = vpack.c.b16 %v213, %v211
    %v288 = vpack.c.b16 %v216, %v214
    %v289 = vpack.c.b16 %v217, %v215
    %v290 = vpack.c.b16 %v220, %v218
    %v291 = vpack.c.b16 %v221, %v219
    %v292 = vpack.c.b16 %v224, %v222
    %v293 = vpack.c.b16 %v225, %v223
    %v294 = vpack.c.b16 %v228, %v226
    %v295 = vpack.c.b16 %v229, %v227
    %v296 = vpack.c.b16 %v232, %v230
    %v297 = vpack.c.b16 %v233, %v231
    %v298 = vpack.c.b16 %v236, %v234
    %v299 = vpack.c.b16 %v237, %v235
    %v300 = vpack.c.b16 %v240, %v238
    %v301 = vpack.c.b16 %v241, %v239
    %v302 = vpack.c.b16 %v244, %v242
    %v303 = vpack.c.b16 %v245, %v243
    %v304 = vpack.c.b16 %v248, %v246
    %v305 = vpack.c.b16 %v249, %v247
    %v306 = vpack.c.b16 %v252, %v250
    %v307 = vpack.c.b16 %v253, %v251
    %v308 = vpack.c.b16 %v256, %v254
    %v309 = vpack.c.b16 %v257, %v255
    %v310 = vpack.c.b16 %v260, %v258
    %v311 = vpack.c.b16 %v261, %v259
    %v312 = vpack.c.b16 %v264, %v262
    %v313 = vpack.c.b16 %v265, %v263
    %v314 = vpack.c.b16 %v268, %v266
    %v315 = vpack.c.b16 %v269, %v267
    %v316 = vpack.c.b16 %v272, %v270
    %v317 = vpack.c.b16 %v273, %v271
    %v318 = vpack.c.b16 %v276, %v274
    %v319 = vpack.c.b16 %v277, %v275
    %v320 = vpack.c.b16 %v280, %v278
    %v321 = vpack.c.b16 %v281, %v279
    %v322 = vpack.c.b16 %v284, %v282
    %v323 = vpack.c.b16 %v285, %v283
    %vm360 = vcmask 359424
    %v362 = vsel %vm360, %v159, 0
    %v365 = vsel %vm360, %v162, 0
    %v368 = vsel %vm360, %v165, 0
    %vm370 = vcmask 1045504
    %v372 = vsel %vm370, %v322, 0
    %v375 = vsel %vm370, %v323, 0
    %377 = vmatprep.subr.bf16.mxu0 %v287
    %378 = vmatpush1.bf16.msra.mxu0 %v286
    %379 = vmatprep.subr.bf16.mxu0 %v289
    %380 = vmatpush1.bf16.msra.mxu0 %v288
    %381 = vmatprep.subr.bf16.mxu0 %v291
    %382 = vmatpush1.bf16.msra.mxu0 %v290
    %383 = vmatprep.subr.bf16.mxu0 %v293
    %384 = vmatpush1.bf16.msra.mxu0 %v292
    %385 = vmatprep.subr.bf16.mxu0 %v295
    %386 = vmatpush1.bf16.msra.mxu0 %v294
    %387 = vmatprep.subr.bf16.mxu0 %v297
    %388 = vmatpush1.bf16.msra.mxu0 %v296
    %389 = vmatprep.subr.bf16.mxu0 %v299
    %390 = vmatpush1.bf16.msra.mxu0 %v298
    %391 = vmatprep.subr.bf16.mxu0 %v301
    %392 = vmatpush1.bf16.msra.mxu0 %v300
    %393 = vmatprep.subr.bf16.mxu0 %v303
    %394 = vmatpush1.bf16.msra.mxu0 %v302
    %395 = vmatprep.subr.bf16.mxu0 %v305
    %396 = vmatpush1.bf16.msra.mxu0 %v304
    %397 = vmatprep.subr.bf16.mxu0 %v307
    %398 = vmatpush1.bf16.msra.mxu0 %v306
    %399 = vmatprep.subr.bf16.mxu0 %v309
    %400 = vmatpush1.bf16.msra.mxu0 %v308
    %401 = vmatprep.subr.bf16.mxu0 %v311
    %402 = vmatpush1.bf16.msra.mxu0 %v310
    %403 = vmatprep.subr.bf16.mxu0 %v313
    %404 = vmatpush1.bf16.msra.mxu0 %v312
    %405 = vmatprep.subr.bf16.mxu0 %v315
    %406 = vmatpush1.bf16.msra.mxu0 %v314
    %407 = vmatprep.subr.bf16.mxu0 %v317
    %408 = vmatpush1.bf16.msra.mxu0 %v316
    %409 = vmatprep.mubr.bf16.mxu0 %v158
    %410 = vmatmul.mubr.bf16.gmra.mrb[0].mxu0 %v157
    %v411 = vpop.f32.mrb[0].mxu0
    %v412 = vadd.f32 0.0, %v411
    %v413 = vpop.f32.mrb[0].mxu0
    %v414 = vadd.f32 0.0, %v413
    %v415 = vpop.f32.mrb[0].mxu0
    %v416 = vadd.f32 0.0, %v415
    %v417 = vpop.f32.mrb[0].mxu0
    %v418 = vadd.f32 0.0, %v417
    %419 = vmatprep.mubr.bf16.mxu0 %v161
    %420 = vmatmul.mubr.bf16.gmra.mrb[0].mxu0 %v160
    %v421 = vpop.f32.mrb[0].mxu0
    %v422 = vadd.f32 0.0, %v421
    %v423 = vpop.f32.mrb[0].mxu0
    %v424 = vadd.f32 0.0, %v423
    %v425 = vpop.f32.mrb[0].mxu0
    %v426 = vadd.f32 0.0, %v425
    %v427 = vpop.f32.mrb[0].mxu0
    %v428 = vadd.f32 0.0, %v427
    %429 = vmatprep.mubr.bf16.mxu0 %v164
    %430 = vmatmul.mubr.bf16.gmra.mrb[0].mxu0 %v163
    %v431 = vpop.f32.mrb[0].mxu0
    %v432 = vadd.f32 0.0, %v431
    %v433 = vpop.f32.mrb[0].mxu0
    %v434 = vadd.f32 0.0, %v433
    %v435 = vpop.f32.mrb[0].mxu0
    %v436 = vadd.f32 0.0, %v435
    %v437 = vpop.f32.mrb[0].mxu0
    %v438 = vadd.f32 0.0, %v437
    %439 = vdwg.mxu0
    %440 = vmatprep.subr.bf16.mxu0 %v319
    %441 = vmatpush1.bf16.msra.mxu0 %v318
    %442 = vmatprep.subr.bf16.mxu0 %v321
    %443 = vmatpush1.bf16.msra.mxu0 %v320
    %444 = vmatprep.subr.bf16.mxu0 %v375
    %445 = vmatpush1.bf16.msra.mxu0 %v372
    %446 = vmatprep.subr.bf16.mxu0 0
    %447 = vmatpush1.bf16.msra.mxu0 0
    %448 = vmatprep.subr.bf16.mxu0 0
    %449 = vmatpush1.bf16.msra.mxu0 0
    %450 = vmatprep.subr.bf16.mxu0 0
    %451 = vmatpush1.bf16.msra.mxu0 0
    %452 = vmatprep.subr.bf16.mxu0 0
    %453 = vmatpush1.bf16.msra.mxu0 0
    %454 = vmatprep.subr.bf16.mxu0 0
    %455 = vmatpush1.bf16.msra.mxu0 0
    %456 = vmatprep.subr.bf16.mxu0 0
    %457 = vmatpush1.bf16.msra.mxu0 0
    %458 = vmatprep.subr.bf16.mxu0 0
    %459 = vmatpush1.bf16.msra.mxu0 0
    %460 = vmatprep.subr.bf16.mxu0 0
    %461 = vmatpush1.bf16.msra.mxu0 0
    %462 = vmatprep.subr.bf16.mxu0 0
    %463 = vmatpush1.bf16.msra.mxu0 0
    %464 = vmatprep.subr.bf16.mxu0 0
    %465 = vmatpush1.bf16.msra.mxu0 0
    %466 = vmatprep.subr.bf16.mxu0 0
    %467 = vmatpush1.bf16.msra.mxu0 0
    %468 = vmatprep.subr.bf16.mxu0 0
    %469 = vmatpush1.bf16.msra.mxu0 0
    %470 = vmatprep.subr.bf16.mxu0 0
    %471 = vmatpush1.bf16.msra.mxu0 0
    %472 = vmatprep.mubr.bf16.mxu0 0
    %473 = vmatmul.mubr.bf16.gmra.mrb[0].mxu0 %v362
    %v474 = vpop.f32.mrb[0].mxu0
    %v475 = vadd.f32 %v412, %v474
    %v476 = vpop.f32.mrb[0].mxu0
    %v477 = vadd.f32 %v414, %v476
    %v478 = vpop.f32.mrb[0].mxu0
    %v479 = vadd.f32 %v416, %v478
    %v480 = vpop.f32.mrb[0].mxu0
    %v481 = vadd.f32 %v418, %v480
    %482 = vmatprep.mubr.bf16.mxu0 0
    %483 = vmatmul.mubr.bf16.gmra.mrb[0].mxu0 %v365
    %v484 = vpop.f32.mrb[0].mxu0
    %v485 = vadd.f32 %v422, %v484
    %v486 = vpop.f32.mrb[0].mxu0
    %v487 = vadd.f32 %v424, %v486
    %v488 = vpop.f32.mrb[0].mxu0
    %v489 = vadd.f32 %v426, %v488
    %v490 = vpop.f32.mrb[0].mxu0
    %v491 = vadd.f32 %v428, %v490
    %492 = vmatprep.mubr.bf16.mxu0 0
    %493 = vmatmul.mubr.bf16.gmra.mrb[0].mxu0 %v368
    %v494 = vpop.f32.mrb[0].mxu0
    %v495 = vadd.f32 %v432, %v494
    %v496 = vpop.f32.mrb[0].mxu0
    %v497 = vadd.f32 %v434, %v496
    %v498 = vpop.f32.mrb[0].mxu0
    %v499 = vadd.f32 %v436, %v498
    %v500 = vpop.f32.mrb[0].mxu0
    %v501 = vadd.f32 %v438, %v500
    %502 = vdwg.mxu0
    %v503 = vsel %vm71, 1, 0
    %v504 = vsel %vm72, 1, 0
    %v505 = vsel %vm73, 1, 0
    %v506 = vsel %vm74, 1, 0
    %v507 = vsel %vm75, 1, 0
    %v508 = vsel %vm76, 1, 0
    %vm509 = vcmp.eq.s32.totalorder %v503, 1
    %vm510 = vcmp.eq.s32.totalorder %v504, 1
    %vm511 = vcmp.eq.s32.totalorder %v505, 1
    %vm512 = vcmp.eq.s32.totalorder %v506, 1
    %vm513 = vcmp.eq.s32.totalorder %v507, 1
    %vm514 = vcmp.eq.s32.totalorder %v508, 1
    %v515 = vsel %vm509, %v475, %v477
    %v516 = vsel %vm510, %v479, %v481
    %v517 = vsel %vm511, %v485, %v487
    %v518 = vsel %vm512, %v489, %v491
    %v519 = vsel %vm513, %v495, %v497
    %v520 = vsel %vm514, %v499, %v501
    %v521 = vld [vmem:[%s3] sm:$0x1]
    %v522 = vld [vmem:[%s4] sm:$0x1]
    %v524 = vlaneseq
    %v525 = vshrl.u32 %v524, 7
    %v526 = vsub.s32 0, %v525
    %v527 = vrot.slane %v521, %v526
    %v530 = vlaneseq
    %v531 = vshrl.u32 %v530, 7
    %v532 = vsub.s32 0, %v531
    %v533 = vrot.slane %v522, %v532
    %v535 = vsel %vm509, %v527, %v533
    %v536 = vsel %vm510, %v527, %v533
    %v537 = vsel %vm511, %v527, %v533
    %v538 = vsel %vm512, %v527, %v533
    %v539 = vsel %vm513, %v527, %v533
    %v540 = vsel %vm514, %v527, %v533
    %v541 = vadd.f32 %v515, %v535
    %v542 = vadd.f32 %v516, %v536
    %v543 = vadd.f32 %v517, %v537
    %v544 = vadd.f32 %v518, %v538
    %v545 = vadd.f32 %v519, %v539
    %v546 = vadd.f32 %v520, %v540
    %v547 = vtanh.pop %v541
    %v548 = vtanh.pop %v542
    %v549 = vtanh.pop %v543
    %v550 = vtanh.pop %v544
    %v551 = vtanh.pop %v545
    %v552 = vtanh.pop %v546
    %v553 = vld [vmem:[%s1] sm:$0xff]
    %v554 = vld [vmem:[%s1 + $0x8] sm:$0xff]
    %v555 = vld [vmem:[%s1 + $0x10] sm:$0xff]
    %v556 = vld [vmem:[%s1 + $0x18] sm:$0xff]
    %v557 = vld [vmem:[%s1 + $0x20] sm:$0xff]
    %v558 = vld [vmem:[%s1 + $0x28] sm:$0xff]
    %v559 = vlaneseq
    %v560 = vand.u32 %v559, 127
    %561 = vset.pattern.permute.xlu0 0
    %562 = vperm.xlu0 %561, %v553
    %v563 = vpop.permute.xlu0 %562
    %564 = vset.pattern.permute.xlu0 0
    %565 = vperm.xlu0 %564, %v554
    %v566 = vpop.permute.xlu0 %565
    %567 = vset.pattern.permute.xlu0 0
    %568 = vperm.xlu0 %567, %v555
    %v569 = vpop.permute.xlu0 %568
    %570 = vset.pattern.permute.xlu0 0
    %571 = vperm.xlu0 %570, %v556
    %v572 = vpop.permute.xlu0 %571
    %573 = vset.pattern.permute.xlu0 0
    %574 = vperm.xlu0 %573, %v557
    %v575 = vpop.permute.xlu0 %574
    %576 = vset.pattern.permute.xlu0 0
    %577 = vperm.xlu0 %576, %v558
    %v578 = vpop.permute.xlu0 %577
    %vm579 = vcmp.eq.s32.totalorder %v560, %v563
    %vm580 = vcmp.eq.s32.totalorder %v560, %v566
    %vm581 = vcmp.eq.s32.totalorder %v560, %v569
    %vm582 = vcmp.eq.s32.totalorder %v560, %v572
    %vm583 = vcmp.eq.s32.totalorder %v560, %v575
    %vm584 = vcmp.eq.s32.totalorder %v560, %v578
    %585 = vset.pattern.permute.xlu0 1
    %586 = vperm.xlu0 %585, %v553
    %v587 = vpop.permute.xlu0 %586
    %588 = vset.pattern.permute.xlu0 1
    %589 = vperm.xlu0 %588, %v554
    %v590 = vpop.permute.xlu0 %589
    %591 = vset.pattern.permute.xlu0 1
    %592 = vperm.xlu0 %591, %v555
    %v593 = vpop.permute.xlu0 %592
    %594 = vset.pattern.permute.xlu0 1
    %595 = vperm.xlu0 %594, %v556
    %v596 = vpop.permute.xlu0 %595
    %597 = vset.pattern.permute.xlu0 1
    %598 = vperm.xlu0 %597, %v557
    %v599 = vpop.permute.xlu0 %598
    %600 = vset.pattern.permute.xlu0 1
    %601 = vperm.xlu0 %600, %v558
    %v602 = vpop.permute.xlu0 %601
    %vm603 = vcmp.eq.s32.totalorder %v560, %v587
    %vm604 = vcmp.eq.s32.totalorder %v560, %v590
    %vm605 = vcmp.eq.s32.totalorder %v560, %v593
    %vm606 = vcmp.eq.s32.totalorder %v560, %v596
    %vm607 = vcmp.eq.s32.totalorder %v560, %v599
    %vm608 = vcmp.eq.s32.totalorder %v560, %v602
    %vm609 = vmor %vm579, %vm603
    %vm610 = vmor %vm580, %vm604
    %vm611 = vmor %vm581, %vm605
    %vm612 = vmor %vm582, %vm606
    %vm613 = vmor %vm583, %vm607
    %vm614 = vmor %vm584, %vm608
    %v615 = vsel %vm609, 1, 0
    %v616 = vsel %vm610, 1, 0
    %v617 = vsel %vm611, 1, 0
    %v618 = vsel %vm612, 1, 0
    %v619 = vsel %vm613, 1, 0
    %v620 = vsel %vm614, 1, 0
    %v621 = vcvt.s32.f32 %v615
    %v622 = vcvt.s32.f32 %v616
    %v623 = vcvt.s32.f32 %v617
    %v624 = vcvt.s32.f32 %v618
    %v625 = vcvt.s32.f32 %v619
    %v626 = vcvt.s32.f32 %v620
    %vm627 = vcmask 179200
    %v629 = vsel %vm627, %v621, 0
    %v632 = vsel %vm627, %v622, 0
    %v635 = vsel %vm627, %v623, 0
    %v638 = vsel %vm627, %v624, 0
    %v641 = vsel %vm627, %v625, 0
    %v644 = vsel %vm627, %v626, 0
    %v647 = vsel %vm370, %v55, 0
    %649 = vmatprep.subr.mxu0 0.0
    %650 = vmatpush1.msra.mxu0 %v53
    %651 = vmatprep.subr.mxu0 0.0
    %652 = vmatpush1.msra.mxu0 %v54
    %653 = vmatprep.subr.mxu0 0.0
    %654 = vmatpush1.msra.mxu0 %v647
    %655 = vmatprep.subr.mxu0 0.0
    %656 = vmatpush1.msra.mxu0 0.0
    %657 = vmatprep.subr.mxu0 0.0
    %658 = vmatpush1.msra.mxu0 0.0
    %659 = vmatprep.subr.mxu0 0.0
    %660 = vmatpush1.msra.mxu0 0.0
    %661 = vmatprep.subr.mxu0 0.0
    %662 = vmatpush1.msra.mxu0 0.0
    %663 = vmatprep.subr.mxu0 0.0
    %664 = vmatpush1.msra.mxu0 0.0
    %665 = vmatprep.subr.mxu0 0.0
    %666 = vmatpush1.msra.mxu0 0.0
    %667 = vmatprep.subr.mxu0 0.0
    %668 = vmatpush1.msra.mxu0 0.0
    %669 = vmatprep.subr.mxu0 0.0
    %670 = vmatpush1.msra.mxu0 0.0
    %671 = vmatprep.subr.mxu0 0.0
    %672 = vmatpush1.msra.mxu0 0.0
    %673 = vmatprep.subr.mxu0 0.0
    %674 = vmatpush1.msra.mxu0 0.0
    %675 = vmatprep.subr.mxu0 0.0
    %676 = vmatpush1.msra.mxu0 0.0
    %677 = vmatprep.subr.mxu0 0.0
    %678 = vmatpush1.msra.mxu0 0.0
    %679 = vmatprep.subr.mxu0 0.0
    %680 = vmatpush1.msra.mxu0 0.0
    %681 = vmatprep.subr.mxu0 0.0
    %682 = vmatpush1.msra.mxu0 0.0
    %683 = vmatprep.subr.mxu0 0.0
    %684 = vmatpush1.msra.mxu0 0.0
    %685 = vmatprep.subr.mxu0 0.0
    %686 = vmatpush1.msra.mxu0 0.0
    %687 = vmatprep.subr.mxu0 0.0
    %688 = vmatpush1.msra.mxu0 0.0
    %689 = vmatprep.subr.mxu0 0.0
    %690 = vmatpush1.msra.mxu0 0.0
    %691 = vmatprep.subr.mxu0 0.0
    %692 = vmatpush1.msra.mxu0 0.0
    %693 = vmatprep.subr.mxu0 0.0
    %694 = vmatpush1.msra.mxu0 0.0
    %695 = vmatprep.subr.mxu0 0.0
    %696 = vmatpush1.msra.mxu0 0.0
    %697 = vmatprep.subr.mxu0 0.0
    %698 = vmatpush1.msra.mxu0 0.0
    %699 = vmatprep.subr.mxu0 0.0
    %700 = vmatpush1.msra.mxu0 0.0
    %701 = vmatprep.subr.mxu0 0.0
    %702 = vmatpush1.msra.mxu0 0.0
    %703 = vmatprep.subr.mxu0 0.0
    %704 = vmatpush1.msra.mxu0 0.0
    %705 = vmatprep.subr.mxu0 0.0
    %706 = vmatpush1.msra.mxu0 0.0
    %707 = vmatprep.subr.mxu0 0.0
    %708 = vmatpush1.msra.mxu0 0.0
    %709 = vmatprep.subr.mxu0 0.0
    %710 = vmatpush1.msra.mxu0 0.0
    %711 = vmatprep.subr.mxu0 0.0
    %712 = vmatpush1.msra.mxu0 0.0
    %713 = vmatprep.mubr.f32.mxu0 0.0
    %714 = vmatmul.mubr.f32.gmra.mrb[0].mxu0 %v629
    %v715 = vpop.f32.mrb[0].mxu0
    %v716 = vadd.f32 0.0, %v715
    %v717 = vpop.f32.mrb[0].mxu0
    %718 = vmatprep.mubr.f32.mxu0 0.0
    %719 = vmatmul.mubr.f32.gmra.mrb[0].mxu0 %v632
    %v720 = vpop.f32.mrb[0].mxu0
    %v721 = vadd.f32 0.0, %v720
    %v722 = vpop.f32.mrb[0].mxu0
    %723 = vmatprep.mubr.f32.mxu0 0.0
    %724 = vmatmul.mubr.f32.gmra.mrb[0].mxu0 %v635
    %v725 = vpop.f32.mrb[0].mxu0
    %v726 = vadd.f32 0.0, %v725
    %v727 = vpop.f32.mrb[0].mxu0
    %728 = vmatprep.mubr.f32.mxu0 0.0
    %729 = vmatmul.mubr.f32.gmra.mrb[0].mxu0 %v638
    %v730 = vpop.f32.mrb[0].mxu0
    %v731 = vadd.f32 0.0, %v730
    %v732 = vpop.f32.mrb[0].mxu0
    %733 = vmatprep.mubr.f32.mxu0 0.0
    %734 = vmatmul.mubr.f32.gmra.mrb[0].mxu0 %v641
    %v735 = vpop.f32.mrb[0].mxu0
    %v736 = vadd.f32 0.0, %v735
    %v737 = vpop.f32.mrb[0].mxu0
    %738 = vmatprep.mubr.f32.mxu0 0.0
    %739 = vmatmul.mubr.f32.gmra.mrb[0].mxu0 %v644
    %v740 = vpop.f32.mrb[0].mxu0
    %v741 = vadd.f32 0.0, %v740
    %v742 = vpop.f32.mrb[0].mxu0
    %743 = vdwg.mxu0
    %v744 = vadd.f32 %v547, %v716
    %v745 = vadd.f32 %v548, %v721
    %v746 = vadd.f32 %v549, %v726
    %v747 = vadd.f32 %v550, %v731
    %v748 = vadd.f32 %v551, %v736
    %v749 = vadd.f32 %v552, %v741
    %750 = vst [vmem:[#allocation7] sm:$0xff] %v744
    %751 = vst [vmem:[#allocation7 + $0x8] sm:$0xff] %v745
    %752 = vst [vmem:[#allocation7 + $0x10] sm:$0xff] %v746
    %753 = vst [vmem:[#allocation7 + $0x18] sm:$0xff] %v747
    %754 = vst [vmem:[#allocation7 + $0x20] sm:$0xff] %v748
    %755 = vst [vmem:[#allocation7 + $0x28] sm:$0xff] %v749
    // Predicated region
    $region34: #{tpu_custom_call.1} parent=1 // pred_check
      _
    $region35: #{tpu_custom_call.1} parent=1 // pred_check_branch
      %757 = sbr.rel (0) target = $region37
    $region36: #{tpu_custom_call.1} parent=1 // pred_region
      %s759 = ssub.s32 768, 768
      %760 = vsyncadd [#allocation4], %s759
      %s761 = sshll.u32 [#allocation7], 4
      %s762 = int_to_ptr.vmem [resolvable:$true] %s761
      %767 = dma.vmem_to_hbm [thread:$0]  %s762, 768, %s6, [#allocation4], 128, 128, 8
    $region37: #{tpu_custom_call.1} parent=1 // pred_fallthru
      _
    // Predicated region
    $region38: #{tpu_custom_call.1} parent=1 // pred_check
      _
    $region39: #{tpu_custom_call.1} parent=1 // pred_check_branch
      %769 = sbr.rel (0) target = $region41
    $region40: #{tpu_custom_call.1} parent=1 // pred_region
      %770 = dma.done [#allocation4], 768
    $region41: #{tpu_custom_call.1} parent=1 // pred_fallthru
      _
    %771 = vsyncpa [#allocation3], 1
    %772 = vsyncpa [#allocation6], 1
    %773 = vsyncpa [#allocation4], 1

</llo_original>
